<compile_context>
chip_gen: v7x
topology: tpu7x:2x2x1
jax: 0.10.0
libtpu: 0.0.40
codegen_flags: <defaults>
</compile_context>

<pallas_src>
import functools

import jax
import jax.numpy as jnp
import numpy as np
from jax.experimental import pallas as pl
from jax.experimental.pallas import tpu as pltpu

_LANE = 128  # TPU lane width; all feature dims are padded to a multiple of this.


def _round_up(n, m):
    return ((n + m - 1) // m) * m


# -----------------------------------------------------------------------------
# Kernel
# -----------------------------------------------------------------------------
def _fused_mlp_kernel(dom_ids_ref, x_ref, w0_ref, b0_ref, w1_ref, b1_ref,
                      w2_ref, b2_ref, o_ref):
    # dom_ids_ref is only consumed by the index_maps (scalar prefetch).
    del dom_ids_ref
    # grad_reverse is identity in the forward pass (it only flips gradients).
    x = x_ref[...]                                             # (tile_m, c_in) bf16
    h0 = jnp.dot(x, w0_ref[...],
                 preferred_element_type=jnp.float32) + b0_ref[...]
    h0 = jnp.maximum(h0, 0.0).astype(jnp.bfloat16)             # ReLU in f32, cast for MXU
    h1 = jnp.dot(h0, w1_ref[...],
                 preferred_element_type=jnp.float32) + b1_ref[...]
    h1 = jnp.maximum(h1, 0.0).astype(jnp.bfloat16)
    # TODO(synk): nn.Dropout() is active only in PyTorch training mode; here we
    # use inference semantics (identity). Training dropout would use
    # pltpu.prng_seed + pltpu.stateful_bernoulli.
    out = jnp.dot(h1, w2_ref[...],
                  preferred_element_type=jnp.float32) + b2_ref[...]
    o_ref[...] = out.astype(o_ref.dtype)


def _vmem_budget(tile_m, c_in, h0, h1, n_out):
    bf16, f32 = 2, 4
    per_buf = (tile_m * c_in * bf16          # x tile
               + tile_m * n_out * f32        # out tile
               + c_in * h0 * bf16 + h0 * f32
               + h0 * h1 * bf16 + h1 * f32
               + h1 * n_out * bf16 + n_out * f32)
    budget = 2 * per_buf + (4 << 20)         # double-buffering + compiler scratch slack
    return int(min(max(budget, 16 << 20), 64 << 20))


@functools.partial(jax.jit, static_argnames=("tile_m",))
def _fused_forward(dom_ids, x_all, w0, b0, w1, b1, w2, b2, *, tile_m=128):
    """One grouped pallas_call over all non-empty domains.

    dom_ids : int32[num_tiles]                per-row-tile domain index (scalar prefetch)
    x_all   : bf16[num_tiles*tile_m, c_in]    concatenated, zero-padded rows
    w*      : bf16[D, in, out]                stacked per-domain weights (lane-padded)
    b*      : f32 [D, 1, out]                 stacked per-domain biases (lane-padded)
    """
    total_rows, c_in = x_all.shape
    h0 = w0.shape[2]
    h1 = w1.shape[2]
    n_out = w2.shape[2]
    num_tiles = total_rows // tile_m

    flops = 2 * total_rows * (c_in * h0 + h0 * h1 + h1 * n_out)
    bytes_accessed = (x_all.size * 2 + total_rows * n_out * 4
                      + (w0.size + w1.size + w2.size) * 2
                      + (b0.size + b1.size + b2.size) * 4)

    return pl.pallas_call(
        _fused_mlp_kernel,
        out_shape=jax.ShapeDtypeStruct((total_rows, n_out), jnp.float32),
        grid_spec=pltpu.PrefetchScalarGridSpec(
            num_scalar_prefetch=1,
            grid=(num_tiles,),
            in_specs=[
                # x rows tiled along the (parallel) grid axis.
                pl.BlockSpec((tile_m, c_in), lambda i, dom: (i, 0)),
                # Per-domain weights/biases selected by the prefetched dom ids;
                # unchanged domain index across consecutive tiles => no re-DMA.
                pl.BlockSpec((None, c_in, h0), lambda i, dom: (dom[i], 0, 0)),
                pl.BlockSpec((None, 1, h0), lambda i, dom: (dom[i], 0, 0)),
                pl.BlockSpec((None, h0, h1), lambda i, dom: (dom[i], 0, 0)),
                pl.BlockSpec((None, 1, h1), lambda i, dom: (dom[i], 0, 0)),
                pl.BlockSpec((None, h1, n_out), lambda i, dom: (dom[i], 0, 0)),
                pl.BlockSpec((None, 1, n_out), lambda i, dom: (dom[i], 0, 0)),
            ],
            out_specs=pl.BlockSpec((tile_m, n_out), lambda i, dom: (i, 0)),
        ),
        compiler_params=pltpu.CompilerParams(
            dimension_semantics=("parallel",),
            vmem_limit_bytes=_vmem_budget(tile_m, c_in, h0, h1, n_out),
        ),
        cost_estimate=pl.CostEstimate(flops=flops, transcendentals=0,
                                      bytes_accessed=bytes_accessed),
    )(dom_ids, x_all, w0, b0, w1, b1, w2, b2)


# -----------------------------------------------------------------------------
# Parameter construction (mirrors ClsNet.__init__ initialization)
# -----------------------------------------------------------------------------
def xavier_uniform(key, fan_in, fan_out, gain=0.1, dtype=jnp.float32):
    # nn.init.xavier_uniform_(w, gain=0.1): U(-a, a), a = gain*sqrt(6/(fan_in+fan_out)).
    a = gain * np.sqrt(6.0 / (fan_in + fan_out))
    # PyTorch stores [out, in]; we store transposed [in, out] so x @ W == x @ W^T.
    return jax.random.uniform(key, (fan_in, fan_out), dtype, minval=-a, maxval=a)


def init_clsnet_params(key, in_channels, num_domains, num_classes,
                       layers=(1024, 256)):
    dims = [in_channels] + list(layers) + [num_classes]
    params = []
    for _ in range(num_domains):
        dom = []
        for li in range(len(dims) - 1):
            key, wk = jax.random.split(key)
            w = xavier_uniform(wk, dims[li], dims[li + 1], gain=0.1)
            b = jnp.zeros((dims[li + 1],), jnp.float32)  # constant_(bias, 0.0)
            dom.append((w, b))
        params.append(dom)
    return params


def prepare_clsnet_weights(params, num_classes, lane=_LANE):
    """Stack per-domain weights once: bf16 weights, f32 biases, every feature
    dim zero-padded up to a lane-dense (multiple-of-128) width."""
    c_in, h0 = params[0][0][0].shape
    _, h1 = params[0][1][0].shape
    _, n_out = params[0][2][0].shape
    c_in_p, h0_p, h1_p, n_out_p = (_round_up(d, lane)
                                   for d in (c_in, h0, h1, n_out))

    def pad_w(w, rp, cp):
        return jnp.pad(w, ((0, rp - w.shape[0]), (0, cp - w.shape[1])))

    def pad_b(b, cp):
        return jnp.pad(b, (0, cp - b.shape[0])).reshape(1, -1)

    w0 = jnp.stack([pad_w(dom[0][0], c_in_p, h0_p) for dom in params]).astype(jnp.bfloat16)
    b0 = jnp.stack([pad_b(dom[0][1], h0_p) for dom in params]).astype(jnp.float32)
    w1 = jnp.stack([pad_w(dom[1][0], h0_p, h1_p) for dom in params]).astype(jnp.bfloat16)
    b1 = jnp.stack([pad_b(dom[1][1], h1_p) for dom in params]).astype(jnp.float32)
    w2 = jnp.stack([pad_w(dom[2][0], h1_p, n_out_p) for dom in params]).astype(jnp.bfloat16)
    b2 = jnp.stack([pad_b(dom[2][1], n_out_p) for dom in params]).astype(jnp.float32)
    return dict(w0=w0, b0=b0, w1=w1, b1=b1, w2=w2, b2=b2,
                in_channels=c_in, num_classes=num_classes)


# -----------------------------------------------------------------------------
# Forward (mirrors ClsNet.forward)
# -----------------------------------------------------------------------------
def clsnet_forward(stacked, x_list, *, tile_m=128):
    """Per-domain classifier outputs; None for empty domains. All non-empty
    domains run in a single grouped Pallas call."""
    num_classes = stacked["num_classes"]
    c_in = stacked["in_channels"]
    c_in_pad = stacked["w0"].shape[1]
    outputs = [None] * len(x_list)
    active = [(d, x) for d, x in enumerate(x_list)
              if x is not None and x.shape[0] > 0]
    if not active:
        return outputs

    x_chunks, dom_ids, layout = [], [], []
    for d, x in active:
        n = x.shape[0]
        n_pad = _round_up(n, tile_m)             # ragged batch -> zero-pad rows
        xb = jnp.pad(x.astype(jnp.bfloat16),
                     ((0, n_pad - n), (0, c_in_pad - c_in)))
        x_chunks.append(xb)
        dom_ids.extend([d] * (n_pad // tile_m))
        layout.append((d, n, n_pad))

    x_all = jnp.concatenate(x_chunks, axis=0)
    dom_ids = jnp.asarray(dom_ids, dtype=jnp.int32)

    out_all = _fused_forward(dom_ids, x_all,
                             stacked["w0"], stacked["b0"],
                             stacked["w1"], stacked["b1"],
                             stacked["w2"], stacked["b2"],
                             tile_m=tile_m)

    row = 0
    for d, n, n_pad in layout:
        outputs[d] = out_all[row:row + n, :num_classes]
        row += n_pad
    return outputs


def _reference_forward(stacked, d, x):
    """Pure-JAX reference with the same bf16-in / f32-accumulate numerics."""
    num_classes = stacked["num_classes"]
    c_in = stacked["in_channels"]
    c_in_pad = stacked["w0"].shape[1]
    xb = jnp.pad(x.astype(jnp.bfloat16), ((0, 0), (0, c_in_pad - c_in)))
    h0 = jnp.maximum(
        jnp.dot(xb, stacked["w0"][d], preferred_element_type=jnp.float32)
        + stacked["b0"][d, 0], 0.0)
    h1 = jnp.maximum(
        jnp.dot(h0.astype(jnp.bfloat16), stacked["w1"][d],
                preferred_element_type=jnp.float32) + stacked["b1"][d, 0], 0.0)
    out = (jnp.dot(h1.astype(jnp.bfloat16), stacked["w2"][d],
                   preferred_element_type=jnp.float32) + stacked["b2"][d, 0])
    return out[:, :num_classes]


if __name__ == "__main__":
    # Small shapes consistent with the module; deliberately NOT multiples of 128
    # to exercise the lane-padding path (padded internally to 128/256/128/128).
    in_channels = 96
    num_domains = 3
    num_classes = 21
    layers = (200, 120)
    tile_m = 128

    key = jax.random.PRNGKey(0)
    key, pkey = jax.random.split(key)
    params = init_clsnet_params(pkey, in_channels, num_domains, num_classes,
                                layers=layers)
    stacked = prepare_clsnet_weights(params, num_classes)

    key, k0, k1 = jax.random.split(key, 3)
    x_list = [
        jax.random.normal(k0, (16, in_channels), jnp.float32),   # ragged
        jax.random.normal(k1, (200, in_channels), jnp.float32),  # ragged, 2 tiles
        jnp.zeros((0, in_channels), jnp.float32),                # empty -> None
    ]

    outs = clsnet_forward(stacked, x_list, tile_m=tile_m)
    outs = [jax.block_until_ready(o) if o is not None else None for o in outs]

    # Empty domain maps to None, like the PyTorch module.
    assert outs[2] is None

    # Correctness check vs. pure-JAX reference (same bf16/f32 numerics).
    for d in (0, 1):
        ref = _reference_forward(stacked, d, x_list[d])
        np.testing.assert_allclose(np.asarray(outs[d]), np.asarray(ref),
                                   rtol=2e-4, atol=2e-5)
        assert outs[d].shape == (x_list[d].shape[0], num_classes)

    print("KERNEL_OK")
</pallas_src>

<mosaic_0001>
module attributes {stable_mosaic.version = 11 : i64} {
  func.func @_fused_mlp_kernel(%arg0: i32, %arg1: memref<3xi32, #tpu.memory_space<smem>>, %arg2: memref<128x128xbf16, #tpu.memory_space<vmem>>, %arg3: memref<1x128x256xbf16, #tpu.memory_space<vmem>>, %arg4: memref<1x1x256xf32, #tpu.memory_space<vmem>>, %arg5: memref<1x256x128xbf16, #tpu.memory_space<vmem>>, %arg6: memref<1x1x128xf32, #tpu.memory_space<vmem>>, %arg7: memref<1x128x128xbf16, #tpu.memory_space<vmem>>, %arg8: memref<1x1x128xf32, #tpu.memory_space<vmem>>, %arg9: memref<128x128xf32, #tpu.memory_space<vmem>>) attributes {dimension_semantics = [#tpu.dimension_semantics<parallel>], iteration_bounds = array<i64: 3>, scalar_prefetch = 1 : i64, scratch_operands = 0 : i64, tpu.core_type = #tpu.core_type<tc>, window_params = [{transform_indices = @transform_0, window_bounds = array<i64: 128, 128>}, {transform_indices = @transform_1, window_bounds = array<i64: 1, 128, 256>}, {transform_indices = @transform_2, window_bounds = array<i64: 1, 1, 256>}, {transform_indices = @transform_3, window_bounds = array<i64: 1, 256, 128>}, {transform_indices = @transform_4, window_bounds = array<i64: 1, 1, 128>}, {transform_indices = @transform_5, window_bounds = array<i64: 1, 128, 128>}, {transform_indices = @transform_6, window_bounds = array<i64: 1, 1, 128>}, {transform_indices = @transform_7, window_bounds = array<i64: 128, 128>}]} {
    %c0 = arith.constant 0 : index
    %c0_0 = arith.constant 0 : index
    %0 = vector.load %arg2[%c0, %c0_0] : memref<128x128xbf16, #tpu.memory_space<vmem>>, vector<128x128xbf16>
    %c0_1 = arith.constant 0 : index
    %c0_2 = arith.constant 0 : index
    %c0_3 = arith.constant 0 : index
    %1 = vector.load %arg3[%c0_1, %c0_2, %c0_3] : memref<1x128x256xbf16, #tpu.memory_space<vmem>>, vector<1x128x256xbf16>
    %2 = vector.shape_cast %1 : vector<1x128x256xbf16> to vector<128x256xbf16>
    %cst = arith.constant dense<0.000000e+00> : vector<128x256xf32>
    %3 = tpu.matmul %0, %2, %cst {dimension_numbers = #tpu.dot_dimension_numbers<[1], [0], [0], [1], [0, 0, 1, 1], [], []>} : vector<128x128xbf16>, vector<128x256xbf16>, vector<128x256xf32> -> vector<128x256xf32>
    %c0_4 = arith.constant 0 : index
    %c0_5 = arith.constant 0 : index
    %c0_6 = arith.constant 0 : index
    %4 = vector.load %arg4[%c0_4, %c0_5, %c0_6] : memref<1x1x256xf32, #tpu.memory_space<vmem>>, vector<1x1x256xf32>
    %5 = vector.shape_cast %4 : vector<1x1x256xf32> to vector<1x256xf32>
    %6 = vector.broadcast %5 : vector<1x256xf32> to vector<128x256xf32>
    %7 = arith.addf %3, %6 : vector<128x256xf32>
    %cst_7 = arith.constant 0.000000e+00 : f32
    %8 = vector.broadcast %cst_7 : f32 to vector<128x256xf32>
    %9 = arith.maximumf %7, %8 : vector<128x256xf32>
    %10 = arith.truncf %9 : vector<128x256xf32> to vector<128x256xbf16>
    %c0_8 = arith.constant 0 : index
    %c0_9 = arith.constant 0 : index
    %c0_10 = arith.constant 0 : index
    %11 = vector.load %arg5[%c0_8, %c0_9, %c0_10] : memref<1x256x128xbf16, #tpu.memory_space<vmem>>, vector<1x256x128xbf16>
    %12 = vector.shape_cast %11 : vector<1x256x128xbf16> to vector<256x128xbf16>
    %cst_11 = arith.constant dense<0.000000e+00> : vector<128x128xf32>
    %13 = tpu.matmul %10, %12, %cst_11 {dimension_numbers = #tpu.dot_dimension_numbers<[1], [0], [0], [1], [0, 0, 1, 1], [], []>} : vector<128x256xbf16>, vector<256x128xbf16>, vector<128x128xf32> -> vector<128x128xf32>
    %c0_12 = arith.constant 0 : index
    %c0_13 = arith.constant 0 : index
    %c0_14 = arith.constant 0 : index
    %14 = vector.load %arg6[%c0_12, %c0_13, %c0_14] : memref<1x1x128xf32, #tpu.memory_space<vmem>>, vector<1x1x128xf32>
    %15 = vector.shape_cast %14 : vector<1x1x128xf32> to vector<1x128xf32>
    %16 = vector.broadcast %15 : vector<1x128xf32> to vector<128x128xf32>
    %17 = arith.addf %13, %16 : vector<128x128xf32>
    %cst_15 = arith.constant 0.000000e+00 : f32
    %18 = vector.broadcast %cst_15 : f32 to vector<128x128xf32>
    %19 = arith.maximumf %17, %18 : vector<128x128xf32>
    %20 = arith.truncf %19 : vector<128x128xf32> to vector<128x128xbf16>
    %c0_16 = arith.constant 0 : index
    %c0_17 = arith.constant 0 : index
    %c0_18 = arith.constant 0 : index
    %21 = vector.load %arg7[%c0_16, %c0_17, %c0_18] : memref<1x128x128xbf16, #tpu.memory_space<vmem>>, vector<1x128x128xbf16>
    %22 = vector.shape_cast %21 : vector<1x128x128xbf16> to vector<128x128xbf16>
    %cst_19 = arith.constant dense<0.000000e+00> : vector<128x128xf32>
    %23 = tpu.matmul %20, %22, %cst_19 {dimension_numbers = #tpu.dot_dimension_numbers<[1], [0], [0], [1], [0, 0, 1, 1], [], []>} : vector<128x128xbf16>, vector<128x128xbf16>, vector<128x128xf32> -> vector<128x128xf32>
    %c0_20 = arith.constant 0 : index
    %c0_21 = arith.constant 0 : index
    %c0_22 = arith.constant 0 : index
    %24 = vector.load %arg8[%c0_20, %c0_21, %c0_22] : memref<1x1x128xf32, #tpu.memory_space<vmem>>, vector<1x1x128xf32>
    %25 = vector.shape_cast %24 : vector<1x1x128xf32> to vector<1x128xf32>
    %26 = vector.broadcast %25 : vector<1x128xf32> to vector<128x128xf32>
    %27 = arith.addf %23, %26 : vector<128x128xf32>
    %c0_23 = arith.constant 0 : index
    %c0_24 = arith.constant 0 : index
    %28 = vector.load %arg9[%c0_23, %c0_24] : memref<128x128xf32, #tpu.memory_space<vmem>>, vector<128x128xf32>
    tpu.vector_store %arg9[%c0_23, %c0_24], %27 {strides = array<i32>} : memref<128x128xf32, #tpu.memory_space<vmem>>, vector<128x128xf32>,
    return
  }
  func.func @transform_0(%arg0: i32, %arg1: memref<3xi32, #tpu.memory_space<smem>>) -> (i32, i32) {
    %c0_i32 = arith.constant 0 : i32
    %c0_i32_0 = arith.constant 0 : i32
    return %arg0, %c0_i32 : i32, i32
  }
  func.func @transform_1(%arg0: i32, %arg1: memref<3xi32, #tpu.memory_space<smem>>) -> (i32, i32, i32) {
    %0 = arith.index_cast %arg0 : i32 to index
    %1 = memref.load %arg1[%0] : memref<3xi32, #tpu.memory_space<smem>>
    %c0_i32 = arith.constant 0 : i32
    %c0_i32_0 = arith.constant 0 : i32
    %c0_i32_1 = arith.constant 0 : i32
    return %1, %c0_i32, %c0_i32_0 : i32, i32, i32
  }
  func.func @transform_2(%arg0: i32, %arg1: memref<3xi32, #tpu.memory_space<smem>>) -> (i32, i32, i32) {
    %0 = arith.index_cast %arg0 : i32 to index
    %1 = memref.load %arg1[%0] : memref<3xi32, #tpu.memory_space<smem>>
    %c0_i32 = arith.constant 0 : i32
    %c0_i32_0 = arith.constant 0 : i32
    %c0_i32_1 = arith.constant 0 : i32
    return %1, %c0_i32, %c0_i32_0 : i32, i32, i32
  }
  func.func @transform_3(%arg0: i32, %arg1: memref<3xi32, #tpu.memory_space<smem>>) -> (i32, i32, i32) {
    %0 = arith.index_cast %arg0 : i32 to index
    %1 = memref.load %arg1[%0] : memref<3xi32, #tpu.memory_space<smem>>
    %c0_i32 = arith.constant 0 : i32
    %c0_i32_0 = arith.constant 0 : i32
    %c0_i32_1 = arith.constant 0 : i32
    return %1, %c0_i32, %c0_i32_0 : i32, i32, i32
  }
  func.func @transform_4(%arg0: i32, %arg1: memref<3xi32, #tpu.memory_space<smem>>) -> (i32, i32, i32) {
    %0 = arith.index_cast %arg0 : i32 to index
    %1 = memref.load %arg1[%0] : memref<3xi32, #tpu.memory_space<smem>>
    %c0_i32 = arith.constant 0 : i32
    %c0_i32_0 = arith.constant 0 : i32
    %c0_i32_1 = arith.constant 0 : i32
    return %1, %c0_i32, %c0_i32_0 : i32, i32, i32
  }
  func.func @transform_5(%arg0: i32, %arg1: memref<3xi32, #tpu.memory_space<smem>>) -> (i32, i32, i32) {
    %0 = arith.index_cast %arg0 : i32 to index
    %1 = memref.load %arg1[%0] : memref<3xi32, #tpu.memory_space<smem>>
    %c0_i32 = arith.constant 0 : i32
    %c0_i32_0 = arith.constant 0 : i32
    %c0_i32_1 = arith.constant 0 : i32
    return %1, %c0_i32, %c0_i32_0 : i32, i32, i32
  }
  func.func @transform_6(%arg0: i32, %arg1: memref<3xi32, #tpu.memory_space<smem>>) -> (i32, i32, i32) {
    %0 = arith.index_cast %arg0 : i32 to index
    %1 = memref.load %arg1[%0] : memref<3xi32, #tpu.memory_space<smem>>
    %c0_i32 = arith.constant 0 : i32
    %c0_i32_0 = arith.constant 0 : i32
    %c0_i32_1 = arith.constant 0 : i32
    return %1, %c0_i32, %c0_i32_0 : i32, i32, i32
  }
  func.func @transform_7(%arg0: i32, %arg1: memref<3xi32, #tpu.memory_space<smem>>) -> (i32, i32) {
    %c0_i32 = arith.constant 0 : i32
    %c0_i32_0 = arith.constant 0 : i32
    return %arg0, %c0_i32 : i32, i32
  }
}

</mosaic_0001>

<llo_original>
// kernel: _fused_forward.1
$region0: #{_fused_forward.1}
  #allocation0 [shape = 'u32[]', space=smem, size = 0x4, offset = 0x4, fixed_abs, tag = 'smem constant byte address 0x4 - core index']
  #allocation1 [shape = 'u32[144,128]{1,0:T(1,128)}', space=vmem, size = 0x12000, scoped, tag = 'internal scratch']
  #allocation2 [shape = 's32[1]{0}', space=sflag, size = 0x4, scoped, tag = 'scoped memory for _fused_forward.1']
  #allocation3 [shape = 'u8[512]{0}', space=smem, size = 0x200, scoped, tag = 'prefetched SMEM operand 0']
  %s0 = inlined_call_operand.hbm [shape: s32[3], index: 0, kind: input, shape index: {}]
  %s1 = inlined_call_operand.hbm [shape: bf16[384,128], index: 1, kind: input, shape index: {}]
  %s2 = inlined_call_operand.hbm [shape: bf16[3,128,256], index: 2, kind: input, shape index: {}]
  %s3 = inlined_call_operand.vmem [shape: f32[3,1,256], index: 3, kind: input, shape index: {}]
  %s4 = inlined_call_operand.hbm [shape: bf16[3,256,128], index: 4, kind: input, shape index: {}]
  %s5 = inlined_call_operand.vmem [shape: f32[3,1,128], index: 5, kind: input, shape index: {}]
  %s6 = inlined_call_operand.hbm [shape: bf16[3,128,128], index: 6, kind: input, shape index: {}]
  %s7 = inlined_call_operand.vmem [shape: f32[3,1,128], index: 7, kind: input, shape index: {}]
  %s8 = inlined_call_operand.hbm [shape: f32[384,128], index: 8, kind: output, shape index: {}]
  %s9 = sld [smem:[#allocation0]]
  $region77: #{_fused_forward.1} parent=0
    _
  %s11 = ssub.s32 1, %s9
  %s12 = scalar_select 0, %s11, %s9
  %14 = dma.hbm_to_smem %s0, 16, [#allocation3], [#allocation2]
  %15 = dma.done [#allocation2], 16
  %16 = sfence
  $region1: #{_fused_forward.1} parent=0
    #allocation4 [shape = 'u8[65536]{0}', space=vmem, size = 0x10000, scoped, tag = 'input window, operand 1']
    #allocation5 [shape = 's32[2]{0}', space=sflag, size = 0x8, scoped, tag = 'scoped memory for _fused_forward.1']
    #allocation6 [shape = 's32[2]{0}', space=sflag, size = 0x8, scoped, tag = 'scoped memory for _fused_forward.1']
    #allocation7 [shape = 'u8[131072]{0}', space=vmem, size = 0x20000, scoped, tag = 'input window, operand 2']
    #allocation8 [shape = 's32[2]{0}', space=sflag, size = 0x8, scoped, tag = 'scoped memory for _fused_forward.1']
    #allocation9 [shape = 'u8[131072]{0}', space=vmem, size = 0x20000, scoped, tag = 'input window, operand 4']
    #allocation10 [shape = 'u8[65536]{0}', space=vmem, size = 0x10000, scoped, tag = 'input window, operand 6']
    #allocation11 [shape = 's32[2]{0}', space=sflag, size = 0x8, scoped, tag = 'scoped memory for _fused_forward.1']
    #allocation12 [shape = 'u8[131072]{0}', space=vmem, size = 0x20000, scoped, tag = 'output window, operand 0']
    %17 = vsyncpa [#allocation5], 0
    %s18 = scalar_lea.sflag [#allocation5], 1
    %19 = vsyncpa %s18, 0
    %20 = vsyncpa [#allocation8], 0
    %s21 = scalar_lea.sflag [#allocation8], 1
    %22 = vsyncpa %s21, 0
    %23 = vsyncpa [#allocation11], 0
    %s24 = scalar_lea.sflag [#allocation11], 1
    %25 = vsyncpa %s24, 0
    %26 = vsyncpa [#allocation6], 0
    %s27 = scalar_lea.sflag [#allocation6], 1
    %28 = vsyncpa %s27, 0
    loop: start=0, step=1, limit=5
    $region2: #{_fused_forward.1} parent=1 // loop_pre_header
      _
    $region3: #{_fused_forward.1} parent=1 // loop_header
      %s30 = sphi 0, %s34
      %p31 = scmp.ge.s32.totalorder %s30, 5
      %s40 = sphi 0, %s42
      %s43 = sphi 0, %s40
      %s44 = sphi 0, %s43
      %s60 = sphi 0, %s44
      %s68 = sphi 0, %s70
      %s71 = sphi 0, %s68
      %s72 = sphi 0, %s71
      %s88 = sphi 0, %s72
      %s96 = sphi 0, %s98
      %s99 = sphi 0, %s96
      %s100 = sphi 0, %s99
      %s116 = sphi 0, %s100
      %s124 = sphi 0, %s126
      %s127 = sphi 0, %s124
      %s128 = sphi 0, %s127
      %s144 = sphi 0, %s128
      %s152 = sphi 0, %s154
      %s155 = sphi 0, %s152
      %s156 = sphi 0, %s155
      %s172 = sphi 0, %s156
      %s180 = sphi 0, %s182
      %s183 = sphi 0, %s180
      %s184 = sphi 0, %s183
      %s200 = sphi 0, %s184
      %s208 = sphi 0, %s210
      %s211 = sphi 0, %s208
      %s212 = sphi 0, %s211
      %s228 = sphi 0, %s212
      %s234 = sphi 0, %s236
      %s237 = sphi 0, %s234
      %s238 = sphi 0, %s237
      %s254 = sphi 0, %s238
    $region4: #{_fused_forward.1} parent=1 // loop_header_branch
      %33 = sbr.rel (%p31) target = $region8
    $region5: #{_fused_forward.1} parent=1 // loop_body
      %s35 = ssub.s32 %s30, 1
      %s36 = ssub.s32 %s30, 2
      %s37 = sadd.s32 %s30, 1
      %s38 = ssub.s32 %s30, %s37
      %p39 = scmp.eq.s32.totalorder %s38, 0
      %s41 = sadd.s32 %s40, 1
      %s42 = scalar_select %p39, %s40, %s41
      %p45 = pneg %p39
      %p46 = scmp.eq.s32.totalorder %s30, 2
      %p47 = por %p45, %p46
      %p48 = scmp.ne.s32.totalorder %s40, %s43
      %p49 = scmp.eq.s32.totalorder %s30, 0
      %p50 = por %p48, %p49
      %p51 = scmp.ne.s32.totalorder %s40, %s43
      %p52 = scmp.eq.s32.totalorder %s35, 2
      %p53 = por %p51, %p52
      %p54 = scmp.ne.s32.totalorder %s43, %s44
      %p55 = scmp.eq.s32.totalorder %s35, 0
      %p56 = por %p54, %p55
      %p57 = scmp.ne.s32.totalorder %s43, %s44
      %p58 = scmp.eq.s32.totalorder %s36, 2
      %p59 = por %p57, %p58
      %p61 = scmp.ne.s32.totalorder %s44, %s60
      %p62 = scmp.eq.s32.totalorder %s36, 0
      %p63 = por %p61, %p62
      %s64 = sld [smem:[#allocation3 + %s30]]
      %s65 = sld [smem:[#allocation3 + %s37]]
      %s66 = ssub.s32 %s64, %s65
      %p67 = scmp.eq.s32.totalorder %s66, 0
      %s69 = sadd.s32 %s68, 1
      %s70 = scalar_select %p67, %s68, %s69
      %p73 = pneg %p67
      %p74 = scmp.eq.s32.totalorder %s30, 2
      %p75 = por %p73, %p74
      %p76 = scmp.ne.s32.totalorder %s68, %s71
      %p77 = scmp.eq.s32.totalorder %s30, 0
      %p78 = por %p76, %p77
      %p79 = scmp.ne.s32.totalorder %s68, %s71
      %p80 = scmp.eq.s32.totalorder %s35, 2
      %p81 = por %p79, %p80
      %p82 = scmp.ne.s32.totalorder %s71, %s72
      %p83 = scmp.eq.s32.totalorder %s35, 0
      %p84 = por %p82, %p83
      %p85 = scmp.ne.s32.totalorder %s71, %s72
      %p86 = scmp.eq.s32.totalorder %s36, 2
      %p87 = por %p85, %p86
      %p89 = scmp.ne.s32.totalorder %s72, %s88
      %p90 = scmp.eq.s32.totalorder %s36, 0
      %p91 = por %p89, %p90
      %s92 = sld [smem:[#allocation3 + %s30]]
      %s93 = sld [smem:[#allocation3 + %s37]]
      %s94 = ssub.s32 %s92, %s93
      %p95 = scmp.eq.s32.totalorder %s94, 0
      %s97 = sadd.s32 %s96, 1
      %s98 = scalar_select %p95, %s96, %s97
      %p101 = pneg %p95
      %p102 = scmp.eq.s32.totalorder %s30, 2
      %p103 = por %p101, %p102
      %p104 = scmp.ne.s32.totalorder %s96, %s99
      %p105 = scmp.eq.s32.totalorder %s30, 0
      %p106 = por %p104, %p105
      %p107 = scmp.ne.s32.totalorder %s96, %s99
      %p108 = scmp.eq.s32.totalorder %s35, 2
      %p109 = por %p107, %p108
      %p110 = scmp.ne.s32.totalorder %s99, %s100
      %p111 = scmp.eq.s32.totalorder %s35, 0
      %p112 = por %p110, %p111
      %p113 = scmp.ne.s32.totalorder %s99, %s100
      %p114 = scmp.eq.s32.totalorder %s36, 2
      %p115 = por %p113, %p114
      %p117 = scmp.ne.s32.totalorder %s100, %s116
      %p118 = scmp.eq.s32.totalorder %s36, 0
      %p119 = por %p117, %p118
      %s120 = sld [smem:[#allocation3 + %s30]]
      %s121 = sld [smem:[#allocation3 + %s37]]
      %s122 = ssub.s32 %s120, %s121
      %p123 = scmp.eq.s32.totalorder %s122, 0
      %s125 = sadd.s32 %s124, 1
      %s126 = scalar_select %p123, %s124, %s125
      %p129 = pneg %p123
      %p130 = scmp.eq.s32.totalorder %s30, 2
      %p131 = por %p129, %p130
      %p132 = scmp.ne.s32.totalorder %s124, %s127
      %p133 = scmp.eq.s32.totalorder %s30, 0
      %p134 = por %p132, %p133
      %p135 = scmp.ne.s32.totalorder %s124, %s127
      %p136 = scmp.eq.s32.totalorder %s35, 2
      %p137 = por %p135, %p136
      %p138 = scmp.ne.s32.totalorder %s127, %s128
      %p139 = scmp.eq.s32.totalorder %s35, 0
      %p140 = por %p138, %p139
      %p141 = scmp.ne.s32.totalorder %s127, %s128
      %p142 = scmp.eq.s32.totalorder %s36, 2
      %p143 = por %p141, %p142
      %p145 = scmp.ne.s32.totalorder %s128, %s144
      %p146 = scmp.eq.s32.totalorder %s36, 0
      %p147 = por %p145, %p146
      %s148 = sld [smem:[#allocation3 + %s30]]
      %s149 = sld [smem:[#allocation3 + %s37]]
      %s150 = ssub.s32 %s148, %s149
      %p151 = scmp.eq.s32.totalorder %s150, 0
      %s153 = sadd.s32 %s152, 1
      %s154 = scalar_select %p151, %s152, %s153
      %p157 = pneg %p151
      %p158 = scmp.eq.s32.totalorder %s30, 2
      %p159 = por %p157, %p158
      %p160 = scmp.ne.s32.totalorder %s152, %s155
      %p161 = scmp.eq.s32.totalorder %s30, 0
      %p162 = por %p160, %p161
      %p163 = scmp.ne.s32.totalorder %s152, %s155
      %p164 = scmp.eq.s32.totalorder %s35, 2
      %p165 = por %p163, %p164
      %p166 = scmp.ne.s32.totalorder %s155, %s156
      %p167 = scmp.eq.s32.totalorder %s35, 0
      %p168 = por %p166, %p167
      %p169 = scmp.ne.s32.totalorder %s155, %s156
      %p170 = scmp.eq.s32.totalorder %s36, 2
      %p171 = por %p169, %p170
      %p173 = scmp.ne.s32.totalorder %s156, %s172
      %p174 = scmp.eq.s32.totalorder %s36, 0
      %p175 = por %p173, %p174
      %s176 = sld [smem:[#allocation3 + %s30]]
      %s177 = sld [smem:[#allocation3 + %s37]]
      %s178 = ssub.s32 %s176, %s177
      %p179 = scmp.eq.s32.totalorder %s178, 0
      %s181 = sadd.s32 %s180, 1
      %s182 = scalar_select %p179, %s180, %s181
      %p185 = pneg %p179
      %p186 = scmp.eq.s32.totalorder %s30, 2
      %p187 = por %p185, %p186
      %p188 = scmp.ne.s32.totalorder %s180, %s183
      %p189 = scmp.eq.s32.totalorder %s30, 0
      %p190 = por %p188, %p189
      %p191 = scmp.ne.s32.totalorder %s180, %s183
      %p192 = scmp.eq.s32.totalorder %s35, 2
      %p193 = por %p191, %p192
      %p194 = scmp.ne.s32.totalorder %s183, %s184
      %p195 = scmp.eq.s32.totalorder %s35, 0
      %p196 = por %p194, %p195
      %p197 = scmp.ne.s32.totalorder %s183, %s184
      %p198 = scmp.eq.s32.totalorder %s36, 2
      %p199 = por %p197, %p198
      %p201 = scmp.ne.s32.totalorder %s184, %s200
      %p202 = scmp.eq.s32.totalorder %s36, 0
      %p203 = por %p201, %p202
      %s204 = sld [smem:[#allocation3 + %s30]]
      %s205 = sld [smem:[#allocation3 + %s37]]
      %s206 = ssub.s32 %s204, %s205
      %p207 = scmp.eq.s32.totalorder %s206, 0
      %s209 = sadd.s32 %s208, 1
      %s210 = scalar_select %p207, %s208, %s209
      %p213 = pneg %p207
      %p214 = scmp.eq.s32.totalorder %s30, 2
      %p215 = por %p213, %p214
      %p216 = scmp.ne.s32.totalorder %s208, %s211
      %p217 = scmp.eq.s32.totalorder %s30, 0
      %p218 = por %p216, %p217
      %p219 = scmp.ne.s32.totalorder %s208, %s211
      %p220 = scmp.eq.s32.totalorder %s35, 2
      %p221 = por %p219, %p220
      %p222 = scmp.ne.s32.totalorder %s211, %s212
      %p223 = scmp.eq.s32.totalorder %s35, 0
      %p224 = por %p222, %p223
      %p225 = scmp.ne.s32.totalorder %s211, %s212
      %p226 = scmp.eq.s32.totalorder %s36, 2
      %p227 = por %p225, %p226
      %p229 = scmp.ne.s32.totalorder %s212, %s228
      %p230 = scmp.eq.s32.totalorder %s36, 0
      %p231 = por %p229, %p230
      %s232 = ssub.s32 %s30, %s37
      %p233 = scmp.eq.s32.totalorder %s232, 0
      %s235 = sadd.s32 %s234, 1
      %s236 = scalar_select %p233, %s234, %s235
      %p239 = pneg %p233
      %p240 = scmp.eq.s32.totalorder %s30, 2
      %p241 = por %p239, %p240
      %p242 = scmp.ne.s32.totalorder %s234, %s237
      %p243 = scmp.eq.s32.totalorder %s30, 0
      %p244 = por %p242, %p243
      %p245 = scmp.ne.s32.totalorder %s234, %s237
      %p246 = scmp.eq.s32.totalorder %s35, 2
      %p247 = por %p245, %p246
      %p248 = scmp.ne.s32.totalorder %s237, %s238
      %p249 = scmp.eq.s32.totalorder %s35, 0
      %p250 = por %p248, %p249
      %p251 = scmp.ne.s32.totalorder %s237, %s238
      %p252 = scmp.eq.s32.totalorder %s36, 2
      %p253 = por %p251, %p252
      %p255 = scmp.ne.s32.totalorder %s238, %s254
      %p256 = scmp.eq.s32.totalorder %s36, 0
      %p257 = por %p255, %p256
      %p258 = scmp.le.s32.totalorder 1, %s30
      %p259 = scmp.lt.s32.totalorder %s30, 4
      %p260 = pnand %p258, %p259
      %p261 = pneg %p260
      // Predicated region
      $region9: #{_fused_forward.1} parent=5 // pred_check
        _
      $region10: #{_fused_forward.1} parent=5 // pred_check_branch
        %263 = sbr.rel (%p260) target = $region12
      $region11: #{_fused_forward.1} parent=5 // pred_region
        %s264 = ssub.s32 %s30, 1
      $region12: #{_fused_forward.1} parent=5 // pred_fallthru
        _
      %p265 = scmp.lt.s32.totalorder %s30, 3
      // Predicated region
      $region13: #{_fused_forward.1} parent=5 // pred_check
        %p266 = pneg %p265
      $region14: #{_fused_forward.1} parent=5 // pred_check_branch
        %268 = sbr.rel (%p266) target = $region16
      $region15: #{_fused_forward.1} parent=5 // pred_region
        // Predicated region
        $region17: #{_fused_forward.1} parent=15 // pred_check
          %p269 = pneg %p50
        $region18: #{_fused_forward.1} parent=15 // pred_check_branch
          %271 = sbr.rel (%p269) target = $region20
        $region19: #{_fused_forward.1} parent=15 // pred_region
          %s272 = sand.u32 %s40, 1
          %s273 = scalar_lea.sflag [#allocation5], %s272
          %s274 = sand.u32 %s40, 1
          %s275 = smul.addr %s274, 64
          %s276 = scalar_lea.vmem [#allocation4], %s275
          %s277 = smul.u32 16, %s30
          %s279 = ssub.s32 1024, 1024
          %280 = vsyncadd %s273, %s279
          %s281 = smul.addr %s277, 64
          %s282 = scalar_lea.hbm %s1, %s281
          %s283 = sshll.u32 %s276, 4
          %s284 = int_to_ptr.vmem [resolvable:$true] %s283
          %289 = dma.hbm_to_vmem [thread:$0]  %s282, 1024, %s284, %s273, 64, 64, 4
        $region20: #{_fused_forward.1} parent=15 // pred_fallthru
          _
        // Predicated region
        $region21: #{_fused_forward.1} parent=15 // pred_check
          %p290 = pneg %p78
        $region22: #{_fused_forward.1} parent=15 // pred_check_branch
          %292 = sbr.rel (%p290) target = $region24
        $region23: #{_fused_forward.1} parent=15 // pred_region
          %s293 = sand.u32 %s30, 1
          %s294 = scalar_lea.sflag [#allocation8], %s293
          %s295 = sand.u32 %s68, 1
          %s296 = smul.addr %s295, 128
          %s297 = scalar_lea.vmem [#allocation7], %s296
          %s298 = sld [smem:[#allocation3 + %s30]]
          %s300 = ssub.s32 2048, 2048
          %301 = vsyncadd %s294, %s300
          %s302 = smul.addr %s298, 32
          %s303 = smul.addr %s302, 64
          %s304 = scalar_lea.hbm %s2, %s303
          %s305 = sshll.u32 %s297, 4
          %s306 = int_to_ptr.vmem [resolvable:$true] %s305
          %311 = dma.hbm_to_vmem [thread:$0]  %s304, 2048, %s306, %s294, 128, 128, 8
        $region24: #{_fused_forward.1} parent=15 // pred_fallthru
          _
        // Predicated region
        $region25: #{_fused_forward.1} parent=15 // pred_check
          %p312 = pneg %p106
        $region26: #{_fused_forward.1} parent=15 // pred_check_branch
          %314 = sbr.rel (%p312) target = $region28
        $region27: #{_fused_forward.1} parent=15 // pred_region
          %s315 = sld [smem:[#allocation3 + %s30]]
          %p316 = scmp.lt.s32.totalorder %s315, 2
          %s317 = scalar_select %p316, %s315, 2
          %s318 = smul.addr %s317, 2
          %s319 = scalar_lea.vmem %s3, %s318
          %s320 = sld [smem:[#allocation3 + %s30]]
        $region28: #{_fused_forward.1} parent=15 // pred_fallthru
          _
        // Predicated region
        $region29: #{_fused_forward.1} parent=15 // pred_check
          %p321 = pneg %p134
        $region30: #{_fused_forward.1} parent=15 // pred_check_branch
          %323 = sbr.rel (%p321) target = $region32
        $region31: #{_fused_forward.1} parent=15 // pred_region
          %s324 = sand.u32 %s30, 1
          %s325 = scalar_lea.sflag [#allocation8], %s324
          %s326 = sand.u32 %s124, 1
          %s327 = smul.addr %s326, 128
          %s328 = scalar_lea.vmem [#allocation9], %s327
          %s329 = sld [smem:[#allocation3 + %s30]]
          %s331 = ssub.s32 2048, 2048
          %332 = vsyncadd %s325, %s331
          %s333 = smul.addr %s329, 32
          %s334 = smul.addr %s333, 64
          %s335 = scalar_lea.hbm %s4, %s334
          %s336 = sshll.u32 %s328, 4
          %s337 = int_to_ptr.vmem [resolvable:$true] %s336
          %342 = dma.hbm_to_vmem [thread:$0]  %s335, 2048, %s337, %s325, 64, 64, 4
        $region32: #{_fused_forward.1} parent=15 // pred_fallthru
          _
        // Predicated region
        $region33: #{_fused_forward.1} parent=15 // pred_check
          %p343 = pneg %p162
        $region34: #{_fused_forward.1} parent=15 // pred_check_branch
          %345 = sbr.rel (%p343) target = $region36
        $region35: #{_fused_forward.1} parent=15 // pred_region
          %s346 = sld [smem:[#allocation3 + %s30]]
          %p347 = scmp.lt.s32.totalorder %s346, 2
          %s348 = scalar_select %p347, %s346, 2
          %s349 = scalar_lea.vmem %s5, %s348
          %s350 = sld [smem:[#allocation3 + %s30]]
        $region36: #{_fused_forward.1} parent=15 // pred_fallthru
          _
        // Predicated region
        $region37: #{_fused_forward.1} parent=15 // pred_check
          %p351 = pneg %p190
        $region38: #{_fused_forward.1} parent=15 // pred_check_branch
          %353 = sbr.rel (%p351) target = $region40
        $region39: #{_fused_forward.1} parent=15 // pred_region
          %s354 = sand.u32 %s180, 1
          %s355 = scalar_lea.sflag [#allocation11], %s354
          %s356 = sand.u32 %s180, 1
          %s357 = smul.addr %s356, 64
          %s358 = scalar_lea.vmem [#allocation10], %s357
          %s359 = sld [smem:[#allocation3 + %s30]]
          %s361 = ssub.s32 1024, 1024
          %362 = vsyncadd %s355, %s361
          %s363 = smul.addr %s359, 16
          %s364 = smul.addr %s363, 64
          %s365 = scalar_lea.hbm %s6, %s364
          %s366 = sshll.u32 %s358, 4
          %s367 = int_to_ptr.vmem [resolvable:$true] %s366
          %372 = dma.hbm_to_vmem [thread:$0]  %s365, 1024, %s367, %s355, 64, 64, 4
        $region40: #{_fused_forward.1} parent=15 // pred_fallthru
          _
        // Predicated region
        $region41: #{_fused_forward.1} parent=15 // pred_check
          %p373 = pneg %p218
        $region42: #{_fused_forward.1} parent=15 // pred_check_branch
          %375 = sbr.rel (%p373) target = $region44
        $region43: #{_fused_forward.1} parent=15 // pred_region
          %s376 = sld [smem:[#allocation3 + %s30]]
          %p377 = scmp.lt.s32.totalorder %s376, 2
          %s378 = scalar_select %p377, %s376, 2
          %s379 = scalar_lea.vmem %s7, %s378
          %s380 = sld [smem:[#allocation3 + %s30]]
        $region44: #{_fused_forward.1} parent=15 // pred_fallthru
          _
      $region16: #{_fused_forward.1} parent=5 // pred_fallthru
        _
      %p381 = scmp.le.s32.totalorder 1, %s30
      %p382 = scmp.lt.s32.totalorder %s30, 4
      %p383 = pnand %p381, %p382
      %p384 = pneg %p383
      // Predicated region
      $region45: #{_fused_forward.1} parent=5 // pred_check
        _
      $region46: #{_fused_forward.1} parent=5 // pred_check_branch
        %386 = sbr.rel (%p383) target = $region48
      $region47: #{_fused_forward.1} parent=5 // pred_region
        %s387 = ssub.s32 %s30, 1
        %s388 = sand.u32 %s43, 1
        %s389 = scalar_lea.sflag [#allocation5], %s388
        %s390 = sand.u32 %s43, 1
        %s391 = smul.addr %s390, 64
        %s392 = scalar_lea.vmem [#allocation4], %s391
        // Predicated region
        $region49: #{_fused_forward.1} parent=47 // pred_check
          %p393 = pneg %p56
        $region50: #{_fused_forward.1} parent=47 // pred_check_branch
          %395 = sbr.rel (%p393) target = $region52
        $region51: #{_fused_forward.1} parent=47 // pred_region
          %396 = dma.done %s389, 1024
        $region52: #{_fused_forward.1} parent=47 // pred_fallthru
          _
        %s397 = sand.u32 %s35, 1
        %s398 = scalar_lea.sflag [#allocation8], %s397
        %s399 = sand.u32 %s71, 1
        %s400 = smul.addr %s399, 128
        %s401 = scalar_lea.vmem [#allocation7], %s400
        // Predicated region
        $region53: #{_fused_forward.1} parent=47 // pred_check
          %p402 = pneg %p84
        $region54: #{_fused_forward.1} parent=47 // pred_check_branch
          %404 = sbr.rel (%p402) target = $region56
        $region55: #{_fused_forward.1} parent=47 // pred_region
          %405 = dma.done %s398, 2048
        $region56: #{_fused_forward.1} parent=47 // pred_fallthru
          _
        %s406 = sand.u32 %s35, 1
        %s407 = scalar_lea.sflag [#allocation8], %s406
        %s408 = sand.u32 %s127, 1
        %s409 = smul.addr %s408, 128
        %s410 = scalar_lea.vmem [#allocation9], %s409
        // Predicated region
        $region57: #{_fused_forward.1} parent=47 // pred_check
          %p411 = pneg %p140
        $region58: #{_fused_forward.1} parent=47 // pred_check_branch
          %413 = sbr.rel (%p411) target = $region60
        $region59: #{_fused_forward.1} parent=47 // pred_region
          %414 = dma.done %s407, 2048
        $region60: #{_fused_forward.1} parent=47 // pred_fallthru
          _
        %s415 = sand.u32 %s183, 1
        %s416 = scalar_lea.sflag [#allocation11], %s415
        %s417 = sand.u32 %s183, 1
        %s418 = smul.addr %s417, 64
        %s419 = scalar_lea.vmem [#allocation10], %s418
        // Predicated region
        $region61: #{_fused_forward.1} parent=47 // pred_check
          %p420 = pneg %p196
        $region62: #{_fused_forward.1} parent=47 // pred_check_branch
          %422 = sbr.rel (%p420) target = $region64
        $region63: #{_fused_forward.1} parent=47 // pred_region
          %423 = dma.done %s416, 1024
        $region64: #{_fused_forward.1} parent=47 // pred_fallthru
          _
        %s424 = sand.u32 %s43, 1
        %s425 = scalar_lea.sflag [#allocation5], %s424
        %s426 = sand.u32 %s43, 1
        %s427 = smul.addr %s426, 64
        %s428 = scalar_lea.vmem [#allocation4], %s427
        %p429 = pneg %p56
        %p430 = pneg %p53
        %s431 = sand.u32 %s35, 1
        %s432 = scalar_lea.sflag [#allocation8], %s431
        %s433 = sand.u32 %s71, 1
        %s434 = smul.addr %s433, 128
        %s435 = scalar_lea.vmem [#allocation7], %s434
        %p436 = pneg %p84
        %p437 = pneg %p81
        %s438 = sld [smem:[#allocation3 + %s35]]
        %p439 = scmp.lt.s32.totalorder %s438, 2
        %s440 = scalar_select %p439, %s438, 2
        %s441 = smul.addr %s440, 2
        %s442 = scalar_lea.vmem %s3, %s441
        %p443 = pneg %p112
        %p444 = pneg %p109
        %s445 = sand.u32 %s35, 1
        %s446 = scalar_lea.sflag [#allocation8], %s445
        %s447 = sand.u32 %s127, 1
        %s448 = smul.addr %s447, 128
        %s449 = scalar_lea.vmem [#allocation9], %s448
        %p450 = pneg %p140
        %p451 = pneg %p137
        %s452 = sld [smem:[#allocation3 + %s35]]
        %p453 = scmp.lt.s32.totalorder %s452, 2
        %s454 = scalar_select %p453, %s452, 2
        %s455 = scalar_lea.vmem %s5, %s454
        %p456 = pneg %p168
        %p457 = pneg %p165
        %s458 = sand.u32 %s183, 1
        %s459 = scalar_lea.sflag [#allocation11], %s458
        %s460 = sand.u32 %s183, 1
        %s461 = smul.addr %s460, 64
        %s462 = scalar_lea.vmem [#allocation10], %s461
        %p463 = pneg %p196
        %p464 = pneg %p193
        %s465 = sld [smem:[#allocation3 + %s35]]
        %p466 = scmp.lt.s32.totalorder %s465, 2
        %s467 = scalar_select %p466, %s465, 2
        %s468 = scalar_lea.vmem %s7, %s467
        %p469 = pneg %p224
        %p470 = pneg %p221
        %p471 = pneg %p250
        %p472 = pneg %p247
        %s473 = sand.u32 %s237, 1
        %s474 = scalar_lea.sflag [#allocation6], %s473
        %s475 = sand.u32 %s237, 1
        %s476 = smul.addr %s475, 128
        %s477 = scalar_lea.vmem [#allocation12], %s476
        %s478 = smul.u32 16, %s35
        %s479 = sld [smem:[#allocation3 + %s35]]
        %s480 = sld [smem:[#allocation3 + %s35]]
        %p481 = scmp.lt.s32.totalorder %s480, 2
        %s482 = scalar_select %p481, %s480, 2
        %s483 = smul.addr %s482, 2
        %s484 = scalar_lea.vmem %s3, %s483
        %s485 = sld [smem:[#allocation3 + %s35]]
        %s486 = sld [smem:[#allocation3 + %s35]]
        %s487 = sld [smem:[#allocation3 + %s35]]
        %p488 = scmp.lt.s32.totalorder %s487, 2
        %s489 = scalar_select %p488, %s487, 2
        %s490 = scalar_lea.vmem %s5, %s489
        %s491 = sld [smem:[#allocation3 + %s35]]
        %s492 = sld [smem:[#allocation3 + %s35]]
        %s493 = sld [smem:[#allocation3 + %s35]]
        %p494 = scmp.lt.s32.totalorder %s493, 2
        %s495 = scalar_select %p494, %s493, 2
        %s496 = scalar_lea.vmem %s7, %s495
        %s497 = sld [smem:[#allocation3 + %s35]]
        %s498 = smul.u32 16, %s35
        %v500 = vld [vmem:[%s392] sm:$0xf]
        %v501 = vld [vmem:[%s392 + $0x4] sm:$0xf]
        %v502 = vld [vmem:[%s392 + $0x8] sm:$0xf]
        %v503 = vld [vmem:[%s392 + $0xc] sm:$0xf]
        %v504 = vld [vmem:[%s392 + $0x10] sm:$0xf]
        %v505 = vld [vmem:[%s392 + $0x14] sm:$0xf]
        %v506 = vld [vmem:[%s392 + $0x18] sm:$0xf]
        %v507 = vld [vmem:[%s392 + $0x1c] sm:$0xf]
        %v508 = vld [vmem:[%s392 + $0x20] sm:$0xf]
        %v509 = vld [vmem:[%s392 + $0x24] sm:$0xf]
        %v510 = vld [vmem:[%s392 + $0x28] sm:$0xf]
        %v511 = vld [vmem:[%s392 + $0x2c] sm:$0xf]
        %v512 = vld [vmem:[%s392 + $0x30] sm:$0xf]
        %v513 = vld [vmem:[%s392 + $0x34] sm:$0xf]
        %v514 = vld [vmem:[%s392 + $0x38] sm:$0xf]
        %v515 = vld [vmem:[%s392 + $0x3c] sm:$0xf]
        %v516 = vld [vmem:[%s401] sm:$0xff]
        %v517 = vld [vmem:[%s401 + $0x8] sm:$0xff]
        %v518 = vld [vmem:[%s401 + $0x10] sm:$0xff]
        %v519 = vld [vmem:[%s401 + $0x18] sm:$0xff]
        %v520 = vld [vmem:[%s401 + $0x20] sm:$0xff]
        %v521 = vld [vmem:[%s401 + $0x28] sm:$0xff]
        %v522 = vld [vmem:[%s401 + $0x30] sm:$0xff]
        %v523 = vld [vmem:[%s401 + $0x38] sm:$0xff]
        %v524 = vld [vmem:[%s401 + $0x40] sm:$0xff]
        %v525 = vld [vmem:[%s401 + $0x48] sm:$0xff]
        %v526 = vld [vmem:[%s401 + $0x50] sm:$0xff]
        %v527 = vld [vmem:[%s401 + $0x58] sm:$0xff]
        %v528 = vld [vmem:[%s401 + $0x60] sm:$0xff]
        %v529 = vld [vmem:[%s401 + $0x68] sm:$0xff]
        %v530 = vld [vmem:[%s401 + $0x70] sm:$0xff]
        %v531 = vld [vmem:[%s401 + $0x78] sm:$0xff]
        %v532 = vld [vmem:[%s484] sm:$0x3]
        %v534 = vlaneseq
        %v535 = vshrl.u32 %v534, 7
        %v536 = vsub.s32 0, %v535
        %v537 = vrot.slane %v532, %v536
        %v538 = vlaneseq
        %v539 = vshrl.u32 %v538, 7
        %v540 = vsub.s32 1, %v539
        %v541 = vrot.slane %v532, %v540
        %v560 = vunpack.c.l.b16 %v500
        %v561 = vunpack.c.l.b16 %v501
        %v562 = vunpack.c.l.b16 %v502
        %v563 = vunpack.c.l.b16 %v503
        %v564 = vunpack.c.l.b16 %v504
        %v565 = vunpack.c.l.b16 %v505
        %v566 = vunpack.c.l.b16 %v506
        %v567 = vunpack.c.l.b16 %v507
        %v568 = vunpack.c.l.b16 %v508
        %v569 = vunpack.c.l.b16 %v509
        %v570 = vunpack.c.l.b16 %v510
        %v571 = vunpack.c.l.b16 %v511
        %v572 = vunpack.c.l.b16 %v512
        %v573 = vunpack.c.l.b16 %v513
        %v574 = vunpack.c.l.b16 %v514
        %v575 = vunpack.c.l.b16 %v515
        %v576 = vpack.c.b16 %v561, %v560
        %v577 = vpack.c.b16 %v563, %v562
        %v578 = vpack.c.b16 %v565, %v564
        %v579 = vpack.c.b16 %v567, %v566
        %v580 = vpack.c.b16 %v569, %v568
        %v581 = vpack.c.b16 %v571, %v570
        %v582 = vpack.c.b16 %v573, %v572
        %v583 = vpack.c.b16 %v575, %v574
        %v608 = vunpack.c.l.b16 %v516
        %v609 = vunpack.c.h.b16 %v516
        %v610 = vunpack.c.l.b16 %v517
        %v611 = vunpack.c.h.b16 %v517
        %v612 = vunpack.c.l.b16 %v518
        %v613 = vunpack.c.h.b16 %v518
        %v614 = vunpack.c.l.b16 %v519
        %v615 = vunpack.c.h.b16 %v519
        %v616 = vunpack.c.l.b16 %v520
        %v617 = vunpack.c.h.b16 %v520
        %v618 = vunpack.c.l.b16 %v521
        %v619 = vunpack.c.h.b16 %v521
        %v620 = vunpack.c.l.b16 %v522
        %v621 = vunpack.c.h.b16 %v522
        %v622 = vunpack.c.l.b16 %v523
        %v623 = vunpack.c.h.b16 %v523
        %v624 = vunpack.c.l.b16 %v524
        %v625 = vunpack.c.h.b16 %v524
        %v626 = vunpack.c.l.b16 %v525
        %v627 = vunpack.c.h.b16 %v525
        %v628 = vunpack.c.l.b16 %v526
        %v629 = vunpack.c.h.b16 %v526
        %v630 = vunpack.c.l.b16 %v527
        %v631 = vunpack.c.h.b16 %v527
        %v632 = vunpack.c.l.b16 %v528
        %v633 = vunpack.c.h.b16 %v528
        %v634 = vunpack.c.l.b16 %v529
        %v635 = vunpack.c.h.b16 %v529
        %v636 = vunpack.c.l.b16 %v530
        %v637 = vunpack.c.h.b16 %v530
        %v638 = vunpack.c.l.b16 %v531
        %v639 = vunpack.c.h.b16 %v531
        %v640 = vpack.c.b16 %v610, %v608
        %v641 = vpack.c.b16 %v611, %v609
        %v642 = vpack.c.b16 %v614, %v612
        %v643 = vpack.c.b16 %v615, %v613
        %v644 = vpack.c.b16 %v618, %v616
        %v645 = vpack.c.b16 %v619, %v617
        %v646 = vpack.c.b16 %v622, %v620
        %v647 = vpack.c.b16 %v623, %v621
        %v648 = vpack.c.b16 %v626, %v624
        %v649 = vpack.c.b16 %v627, %v625
        %v650 = vpack.c.b16 %v630, %v628
        %v651 = vpack.c.b16 %v631, %v629
        %v652 = vpack.c.b16 %v634, %v632
        %v653 = vpack.c.b16 %v635, %v633
        %v654 = vpack.c.b16 %v638, %v636
        %v655 = vpack.c.b16 %v639, %v637
        %672 = vmatprep.subr.bf16.mxu0 %v641
        %673 = vmatpush1.bf16.msra.mxu0 %v640
        %674 = vmatprep.subr.bf16.mxu0 %v643
        %675 = vmatpush1.bf16.msra.mxu0 %v642
        %676 = vmatprep.subr.bf16.mxu0 %v645
        %677 = vmatpush1.bf16.msra.mxu0 %v644
        %678 = vmatprep.subr.bf16.mxu0 %v647
        %679 = vmatpush1.bf16.msra.mxu0 %v646
        %680 = vmatprep.subr.bf16.mxu0 %v649
        %681 = vmatpush1.bf16.msra.mxu0 %v648
        %682 = vmatprep.subr.bf16.mxu0 %v651
        %683 = vmatpush1.bf16.msra.mxu0 %v650
        %684 = vmatprep.subr.bf16.mxu0 %v653
        %685 = vmatpush1.bf16.msra.mxu0 %v652
        %686 = vmatprep.subr.bf16.mxu0 %v655
        %687 = vmatpush1.bf16.msra.mxu0 %v654
        %688 = vmatprep.subr.bf16.mxu0 0
        %689 = vmatpush1.bf16.msra.mxu0 0
        %690 = vmatprep.subr.bf16.mxu0 0
        %691 = vmatpush1.bf16.msra.mxu0 0
        %692 = vmatprep.subr.bf16.mxu0 0
        %693 = vmatpush1.bf16.msra.mxu0 0
        %694 = vmatprep.subr.bf16.mxu0 0
        %695 = vmatpush1.bf16.msra.mxu0 0
        %696 = vmatprep.subr.bf16.mxu0 0
        %697 = vmatpush1.bf16.msra.mxu0 0
        %698 = vmatprep.subr.bf16.mxu0 0
        %699 = vmatpush1.bf16.msra.mxu0 0
        %700 = vmatprep.subr.bf16.mxu0 0
        %701 = vmatpush1.bf16.msra.mxu0 0
        %702 = vmatprep.subr.bf16.mxu0 0
        %703 = vmatpush1.bf16.msra.mxu0 0
        %704 = vmatprep.mubr.bf16.mxu0 0
        %705 = vmatmul.mubr.bf16.gmra.mrb[0].mxu0 %v576
        %v706 = vpop.f32.mrb[0].mxu0
        %v707 = vadd.f32 %v537, %v706
        %v708 = vpop.f32.mrb[0].mxu0
        %v709 = vadd.f32 %v541, %v708
        %v710 = vpop.f32.mrb[0].mxu0
        %v711 = vadd.f32 %v537, %v710
        %v712 = vpop.f32.mrb[0].mxu0
        %v713 = vadd.f32 %v541, %v712
        %714 = vmatprep.mubr.bf16.mxu0 0
        %715 = vmatmul.mubr.bf16.gmra.mrb[0].mxu0 %v577
        %v716 = vpop.f32.mrb[0].mxu0
        %v717 = vadd.f32 %v537, %v716
        %v718 = vpop.f32.mrb[0].mxu0
        %v719 = vadd.f32 %v541, %v718
        %v720 = vpop.f32.mrb[0].mxu0
        %v721 = vadd.f32 %v537, %v720
        %v722 = vpop.f32.mrb[0].mxu0
        %v723 = vadd.f32 %v541, %v722
        %724 = vmatprep.mubr.bf16.mxu0 0
        %725 = vmatmul.mubr.bf16.gmra.mrb[0].mxu0 %v578
        %v726 = vpop.f32.mrb[0].mxu0
        %v727 = vadd.f32 %v537, %v726
        %v728 = vpop.f32.mrb[0].mxu0
        %v729 = vadd.f32 %v541, %v728
        %v730 = vpop.f32.mrb[0].mxu0
        %v731 = vadd.f32 %v537, %v730
        %v732 = vpop.f32.mrb[0].mxu0
        %v733 = vadd.f32 %v541, %v732
        %734 = vmatprep.mubr.bf16.mxu0 0
        %735 = vmatmul.mubr.bf16.gmra.mrb[0].mxu0 %v579
        %v736 = vpop.f32.mrb[0].mxu0
        %v737 = vadd.f32 %v537, %v736
        %v738 = vpop.f32.mrb[0].mxu0
        %v739 = vadd.f32 %v541, %v738
        %v740 = vpop.f32.mrb[0].mxu0
        %v741 = vadd.f32 %v537, %v740
        %v742 = vpop.f32.mrb[0].mxu0
        %v743 = vadd.f32 %v541, %v742
        %744 = vmatprep.mubr.bf16.mxu0 0
        %745 = vmatmul.mubr.bf16.gmra.mrb[0].mxu0 %v580
        %v746 = vpop.f32.mrb[0].mxu0
        %v747 = vadd.f32 %v537, %v746
        %v748 = vpop.f32.mrb[0].mxu0
        %v749 = vadd.f32 %v541, %v748
        %v750 = vpop.f32.mrb[0].mxu0
        %v751 = vadd.f32 %v537, %v750
        %v752 = vpop.f32.mrb[0].mxu0
        %v753 = vadd.f32 %v541, %v752
        %754 = vmatprep.mubr.bf16.mxu0 0
        %755 = vmatmul.mubr.bf16.gmra.mrb[0].mxu0 %v581
        %v756 = vpop.f32.mrb[0].mxu0
        %v757 = vadd.f32 %v537, %v756
        %v758 = vpop.f32.mrb[0].mxu0
        %v759 = vadd.f32 %v541, %v758
        %v760 = vpop.f32.mrb[0].mxu0
        %v761 = vadd.f32 %v537, %v760
        %v762 = vpop.f32.mrb[0].mxu0
        %v763 = vadd.f32 %v541, %v762
        %764 = vmatprep.mubr.bf16.mxu0 0
        %765 = vmatmul.mubr.bf16.gmra.mrb[0].mxu0 %v582
        %v766 = vpop.f32.mrb[0].mxu0
        %v767 = vadd.f32 %v537, %v766
        %v768 = vpop.f32.mrb[0].mxu0
        %v769 = vadd.f32 %v541, %v768
        %v770 = vpop.f32.mrb[0].mxu0
        %v771 = vadd.f32 %v537, %v770
        %v772 = vpop.f32.mrb[0].mxu0
        %v773 = vadd.f32 %v541, %v772
        %774 = vmatprep.mubr.bf16.mxu0 0
        %775 = vmatmul.mubr.bf16.gmra.mrb[0].mxu0 %v583
        %v776 = vpop.f32.mrb[0].mxu0
        %v777 = vadd.f32 %v537, %v776
        %v778 = vpop.f32.mrb[0].mxu0
        %v779 = vadd.f32 %v541, %v778
        %v780 = vpop.f32.mrb[0].mxu0
        %v781 = vadd.f32 %v537, %v780
        %v782 = vpop.f32.mrb[0].mxu0
        %v783 = vadd.f32 %v541, %v782
        %784 = vdwg.mxu0
        %v785 = vmax.f32 %v707, 0.0
        %v786 = vmax.f32 %v709, 0.0
        %v787 = vmax.f32 %v711, 0.0
        %v788 = vmax.f32 %v713, 0.0
        %v789 = vmax.f32 %v717, 0.0
        %v790 = vmax.f32 %v719, 0.0
        %v791 = vmax.f32 %v721, 0.0
        %v792 = vmax.f32 %v723, 0.0
        %v793 = vmax.f32 %v727, 0.0
        %v794 = vmax.f32 %v729, 0.0
        %v795 = vmax.f32 %v731, 0.0
        %v796 = vmax.f32 %v733, 0.0
        %v797 = vmax.f32 %v737, 0.0
        %v798 = vmax.f32 %v739, 0.0
        %v799 = vmax.f32 %v741, 0.0
        %v800 = vmax.f32 %v743, 0.0
        %v801 = vmax.f32 %v747, 0.0
        %v802 = vmax.f32 %v749, 0.0
        %v803 = vmax.f32 %v751, 0.0
        %v804 = vmax.f32 %v753, 0.0
        %v805 = vmax.f32 %v757, 0.0
        %v806 = vmax.f32 %v759, 0.0
        %v807 = vmax.f32 %v761, 0.0
        %v808 = vmax.f32 %v763, 0.0
        %v809 = vmax.f32 %v767, 0.0
        %v810 = vmax.f32 %v769, 0.0
        %v811 = vmax.f32 %v771, 0.0
        %v812 = vmax.f32 %v773, 0.0
        %v813 = vmax.f32 %v777, 0.0
        %v814 = vmax.f32 %v779, 0.0
        %v815 = vmax.f32 %v781, 0.0
        %v816 = vmax.f32 %v783, 0.0
        %v817 = vpack.c.bf16 %v787, %v785
        %v818 = vpack.c.bf16 %v788, %v786
        %v819 = vpack.c.bf16 %v791, %v789
        %v820 = vpack.c.bf16 %v792, %v790
        %v821 = vpack.c.bf16 %v795, %v793
        %v822 = vpack.c.bf16 %v796, %v794
        %v823 = vpack.c.bf16 %v799, %v797
        %v824 = vpack.c.bf16 %v800, %v798
        %v825 = vpack.c.bf16 %v803, %v801
        %v826 = vpack.c.bf16 %v804, %v802
        %v827 = vpack.c.bf16 %v807, %v805
        %v828 = vpack.c.bf16 %v808, %v806
        %v829 = vpack.c.bf16 %v811, %v809
        %v830 = vpack.c.bf16 %v812, %v810
        %v831 = vpack.c.bf16 %v815, %v813
        %v832 = vpack.c.bf16 %v816, %v814
        %v833 = vld [vmem:[%s410] sm:$0xf]
        %v834 = vld [vmem:[%s410 + $0x4] sm:$0xf]
        %v835 = vld [vmem:[%s410 + $0x8] sm:$0xf]
        %v836 = vld [vmem:[%s410 + $0xc] sm:$0xf]
        %v837 = vld [vmem:[%s410 + $0x10] sm:$0xf]
        %v838 = vld [vmem:[%s410 + $0x14] sm:$0xf]
        %v839 = vld [vmem:[%s410 + $0x18] sm:$0xf]
        %v840 = vld [vmem:[%s410 + $0x1c] sm:$0xf]
        %v841 = vld [vmem:[%s410 + $0x20] sm:$0xf]
        %v842 = vld [vmem:[%s410 + $0x24] sm:$0xf]
        %v843 = vld [vmem:[%s410 + $0x28] sm:$0xf]
        %v844 = vld [vmem:[%s410 + $0x2c] sm:$0xf]
        %v845 = vld [vmem:[%s410 + $0x30] sm:$0xf]
        %v846 = vld [vmem:[%s410 + $0x34] sm:$0xf]
        %v847 = vld [vmem:[%s410 + $0x38] sm:$0xf]
        %v848 = vld [vmem:[%s410 + $0x3c] sm:$0xf]
        %v849 = vld [vmem:[%s410 + $0x40] sm:$0xf]
        %v850 = vld [vmem:[%s410 + $0x44] sm:$0xf]
        %v851 = vld [vmem:[%s410 + $0x48] sm:$0xf]
        %v852 = vld [vmem:[%s410 + $0x4c] sm:$0xf]
        %v853 = vld [vmem:[%s410 + $0x50] sm:$0xf]
        %v854 = vld [vmem:[%s410 + $0x54] sm:$0xf]
        %v855 = vld [vmem:[%s410 + $0x58] sm:$0xf]
        %v856 = vld [vmem:[%s410 + $0x5c] sm:$0xf]
        %v857 = vld [vmem:[%s410 + $0x60] sm:$0xf]
        %v858 = vld [vmem:[%s410 + $0x64] sm:$0xf]
        %v859 = vld [vmem:[%s410 + $0x68] sm:$0xf]
        %v860 = vld [vmem:[%s410 + $0x6c] sm:$0xf]
        %v861 = vld [vmem:[%s410 + $0x70] sm:$0xf]
        %v862 = vld [vmem:[%s410 + $0x74] sm:$0xf]
        %v863 = vld [vmem:[%s410 + $0x78] sm:$0xf]
        %v864 = vld [vmem:[%s410 + $0x7c] sm:$0xf]
        %v865 = vld [vmem:[%s490] sm:$0x1]
        %v867 = vlaneseq
        %v868 = vshrl.u32 %v867, 7
        %v869 = vsub.s32 0, %v868
        %v870 = vrot.slane %v865, %v869
        %v904 = vunpack.c.l.b16 %v833
        %v905 = vunpack.c.l.b16 %v834
        %v906 = vunpack.c.l.b16 %v835
        %v907 = vunpack.c.l.b16 %v836
        %v908 = vunpack.c.l.b16 %v837
        %v909 = vunpack.c.l.b16 %v838
        %v910 = vunpack.c.l.b16 %v839
        %v911 = vunpack.c.l.b16 %v840
        %v912 = vunpack.c.l.b16 %v841
        %v913 = vunpack.c.l.b16 %v842
        %v914 = vunpack.c.l.b16 %v843
        %v915 = vunpack.c.l.b16 %v844
        %v916 = vunpack.c.l.b16 %v845
        %v917 = vunpack.c.l.b16 %v846
        %v918 = vunpack.c.l.b16 %v847
        %v919 = vunpack.c.l.b16 %v848
        %v920 = vunpack.c.l.b16 %v849
        %v921 = vunpack.c.l.b16 %v850
        %v922 = vunpack.c.l.b16 %v851
        %v923 = vunpack.c.l.b16 %v852
        %v924 = vunpack.c.l.b16 %v853
        %v925 = vunpack.c.l.b16 %v854
        %v926 = vunpack.c.l.b16 %v855
        %v927 = vunpack.c.l.b16 %v856
        %v928 = vunpack.c.l.b16 %v857
        %v929 = vunpack.c.l.b16 %v858
        %v930 = vunpack.c.l.b16 %v859
        %v931 = vunpack.c.l.b16 %v860
        %v932 = vunpack.c.l.b16 %v861
        %v933 = vunpack.c.l.b16 %v862
        %v934 = vunpack.c.l.b16 %v863
        %v935 = vunpack.c.l.b16 %v864
        %v936 = vpack.c.b16 %v905, %v904
        %v937 = vpack.c.b16 %v907, %v906
        %v938 = vpack.c.b16 %v909, %v908
        %v939 = vpack.c.b16 %v911, %v910
        %v940 = vpack.c.b16 %v913, %v912
        %v941 = vpack.c.b16 %v915, %v914
        %v942 = vpack.c.b16 %v917, %v916
        %v943 = vpack.c.b16 %v919, %v918
        %v944 = vpack.c.b16 %v921, %v920
        %v945 = vpack.c.b16 %v923, %v922
        %v946 = vpack.c.b16 %v925, %v924
        %v947 = vpack.c.b16 %v927, %v926
        %v948 = vpack.c.b16 %v929, %v928
        %v949 = vpack.c.b16 %v931, %v930
        %v950 = vpack.c.b16 %v933, %v932
        %v951 = vpack.c.b16 %v935, %v934
        %968 = vmatprep.subr.bf16.mxu0 0
        %969 = vmatpush1.bf16.msra.mxu0 %v936
        %970 = vmatprep.subr.bf16.mxu0 0
        %971 = vmatpush1.bf16.msra.mxu0 %v937
        %972 = vmatprep.subr.bf16.mxu0 0
        %973 = vmatpush1.bf16.msra.mxu0 %v938
        %974 = vmatprep.subr.bf16.mxu0 0
        %975 = vmatpush1.bf16.msra.mxu0 %v939
        %976 = vmatprep.subr.bf16.mxu0 0
        %977 = vmatpush1.bf16.msra.mxu0 %v940
        %978 = vmatprep.subr.bf16.mxu0 0
        %979 = vmatpush1.bf16.msra.mxu0 %v941
        %980 = vmatprep.subr.bf16.mxu0 0
        %981 = vmatpush1.bf16.msra.mxu0 %v942
        %982 = vmatprep.subr.bf16.mxu0 0
        %983 = vmatpush1.bf16.msra.mxu0 %v943
        %984 = vmatprep.subr.bf16.mxu0 0
        %985 = vmatpush1.bf16.msra.mxu0 %v944
        %986 = vmatprep.subr.bf16.mxu0 0
        %987 = vmatpush1.bf16.msra.mxu0 %v945
        %988 = vmatprep.subr.bf16.mxu0 0
        %989 = vmatpush1.bf16.msra.mxu0 %v946
        %990 = vmatprep.subr.bf16.mxu0 0
        %991 = vmatpush1.bf16.msra.mxu0 %v947
        %992 = vmatprep.subr.bf16.mxu0 0
        %993 = vmatpush1.bf16.msra.mxu0 %v948
        %994 = vmatprep.subr.bf16.mxu0 0
        %995 = vmatpush1.bf16.msra.mxu0 %v949
        %996 = vmatprep.subr.bf16.mxu0 0
        %997 = vmatpush1.bf16.msra.mxu0 %v950
        %998 = vmatprep.subr.bf16.mxu0 0
        %999 = vmatpush1.bf16.msra.mxu0 %v951
        %1000 = vmatprep.mubr.bf16.mxu0 %v818
        %1001 = vmatmul.mubr.bf16.gmra.mrb[0].mxu0 %v817
        %v1002 = vpop.f32.mrb[0].mxu0
        %v1003 = vadd.f32 %v870, %v1002
        %v1004 = vpop.f32.mrb[0].mxu0
        %v1005 = vpop.f32.mrb[0].mxu0
        %v1006 = vadd.f32 %v870, %v1005
        %v1007 = vpop.f32.mrb[0].mxu0
        %1008 = vmatprep.mubr.bf16.mxu0 %v820
        %1009 = vmatmul.mubr.bf16.gmra.mrb[0].mxu0 %v819
        %v1010 = vpop.f32.mrb[0].mxu0
        %v1011 = vadd.f32 %v870, %v1010
        %v1012 = vpop.f32.mrb[0].mxu0
        %v1013 = vpop.f32.mrb[0].mxu0
        %v1014 = vadd.f32 %v870, %v1013
        %v1015 = vpop.f32.mrb[0].mxu0
        %1016 = vmatprep.mubr.bf16.mxu0 %v822
        %1017 = vmatmul.mubr.bf16.gmra.mrb[0].mxu0 %v821
        %v1018 = vpop.f32.mrb[0].mxu0
        %v1019 = vadd.f32 %v870, %v1018
        %v1020 = vpop.f32.mrb[0].mxu0
        %v1021 = vpop.f32.mrb[0].mxu0
        %v1022 = vadd.f32 %v870, %v1021
        %v1023 = vpop.f32.mrb[0].mxu0
        %1024 = vmatprep.mubr.bf16.mxu0 %v824
        %1025 = vmatmul.mubr.bf16.gmra.mrb[0].mxu0 %v823
        %v1026 = vpop.f32.mrb[0].mxu0
        %v1027 = vadd.f32 %v870, %v1026
        %v1028 = vpop.f32.mrb[0].mxu0
        %v1029 = vpop.f32.mrb[0].mxu0
        %v1030 = vadd.f32 %v870, %v1029
        %v1031 = vpop.f32.mrb[0].mxu0
        %1032 = vmatprep.mubr.bf16.mxu0 %v826
        %1033 = vmatmul.mubr.bf16.gmra.mrb[0].mxu0 %v825
        %v1034 = vpop.f32.mrb[0].mxu0
        %v1035 = vadd.f32 %v870, %v1034
        %v1036 = vpop.f32.mrb[0].mxu0
        %v1037 = vpop.f32.mrb[0].mxu0
        %v1038 = vadd.f32 %v870, %v1037
        %v1039 = vpop.f32.mrb[0].mxu0
        %1040 = vmatprep.mubr.bf16.mxu0 %v828
        %1041 = vmatmul.mubr.bf16.gmra.mrb[0].mxu0 %v827
        %v1042 = vpop.f32.mrb[0].mxu0
        %v1043 = vadd.f32 %v870, %v1042
        %v1044 = vpop.f32.mrb[0].mxu0
        %v1045 = vpop.f32.mrb[0].mxu0
        %v1046 = vadd.f32 %v870, %v1045
        %v1047 = vpop.f32.mrb[0].mxu0
        %1048 = vmatprep.mubr.bf16.mxu0 %v830
        %1049 = vmatmul.mubr.bf16.gmra.mrb[0].mxu0 %v829
        %v1050 = vpop.f32.mrb[0].mxu0
        %v1051 = vadd.f32 %v870, %v1050
        %v1052 = vpop.f32.mrb[0].mxu0
        %v1053 = vpop.f32.mrb[0].mxu0
        %v1054 = vadd.f32 %v870, %v1053
        %v1055 = vpop.f32.mrb[0].mxu0
        %1056 = vmatprep.mubr.bf16.mxu0 %v832
        %1057 = vmatmul.mubr.bf16.gmra.mrb[0].mxu0 %v831
        %v1058 = vpop.f32.mrb[0].mxu0
        %v1059 = vadd.f32 %v870, %v1058
        %v1060 = vpop.f32.mrb[0].mxu0
        %v1061 = vpop.f32.mrb[0].mxu0
        %v1062 = vadd.f32 %v870, %v1061
        %v1063 = vpop.f32.mrb[0].mxu0
        %1064 = vdwg.mxu0
        %v1065 = vmax.f32 %v1003, 0.0
        %v1066 = vmax.f32 %v1006, 0.0
        %v1067 = vmax.f32 %v1011, 0.0
        %v1068 = vmax.f32 %v1014, 0.0
        %v1069 = vmax.f32 %v1019, 0.0
        %v1070 = vmax.f32 %v1022, 0.0
        %v1071 = vmax.f32 %v1027, 0.0
        %v1072 = vmax.f32 %v1030, 0.0
        %v1073 = vmax.f32 %v1035, 0.0
        %v1074 = vmax.f32 %v1038, 0.0
        %v1075 = vmax.f32 %v1043, 0.0
        %v1076 = vmax.f32 %v1046, 0.0
        %v1077 = vmax.f32 %v1051, 0.0
        %v1078 = vmax.f32 %v1054, 0.0
        %v1079 = vmax.f32 %v1059, 0.0
        %v1080 = vmax.f32 %v1062, 0.0
        %v1081 = vpack.c.bf16 %v1066, %v1065
        %v1082 = vpack.c.bf16 %v1068, %v1067
        %v1083 = vpack.c.bf16 %v1070, %v1069
        %v1084 = vpack.c.bf16 %v1072, %v1071
        %v1085 = vpack.c.bf16 %v1074, %v1073
        %v1086 = vpack.c.bf16 %v1076, %v1075
        %v1087 = vpack.c.bf16 %v1078, %v1077
        %v1088 = vpack.c.bf16 %v1080, %v1079
        %v1089 = vld [vmem:[%s419] sm:$0xf]
        %v1090 = vld [vmem:[%s419 + $0x4] sm:$0xf]
        %v1091 = vld [vmem:[%s419 + $0x8] sm:$0xf]
        %v1092 = vld [vmem:[%s419 + $0xc] sm:$0xf]
        %v1093 = vld [vmem:[%s419 + $0x10] sm:$0xf]
        %v1094 = vld [vmem:[%s419 + $0x14] sm:$0xf]
        %v1095 = vld [vmem:[%s419 + $0x18] sm:$0xf]
        %v1096 = vld [vmem:[%s419 + $0x1c] sm:$0xf]
        %v1097 = vld [vmem:[%s419 + $0x20] sm:$0xf]
        %v1098 = vld [vmem:[%s419 + $0x24] sm:$0xf]
        %v1099 = vld [vmem:[%s419 + $0x28] sm:$0xf]
        %v1100 = vld [vmem:[%s419 + $0x2c] sm:$0xf]
        %v1101 = vld [vmem:[%s419 + $0x30] sm:$0xf]
        %v1102 = vld [vmem:[%s419 + $0x34] sm:$0xf]
        %v1103 = vld [vmem:[%s419 + $0x38] sm:$0xf]
        %v1104 = vld [vmem:[%s419 + $0x3c] sm:$0xf]
        %v1105 = vld [vmem:[%s496] sm:$0x1]
        %v1107 = vlaneseq
        %v1108 = vshrl.u32 %v1107, 7
        %v1109 = vsub.s32 0, %v1108
        %v1110 = vrot.slane %v1105, %v1109
        %v1128 = vunpack.c.l.b16 %v1089
        %v1129 = vunpack.c.l.b16 %v1090
        %v1130 = vunpack.c.l.b16 %v1091
        %v1131 = vunpack.c.l.b16 %v1092
        %v1132 = vunpack.c.l.b16 %v1093
        %v1133 = vunpack.c.l.b16 %v1094
        %v1134 = vunpack.c.l.b16 %v1095
        %v1135 = vunpack.c.l.b16 %v1096
        %v1136 = vunpack.c.l.b16 %v1097
        %v1137 = vunpack.c.l.b16 %v1098
        %v1138 = vunpack.c.l.b16 %v1099
        %v1139 = vunpack.c.l.b16 %v1100
        %v1140 = vunpack.c.l.b16 %v1101
        %v1141 = vunpack.c.l.b16 %v1102
        %v1142 = vunpack.c.l.b16 %v1103
        %v1143 = vunpack.c.l.b16 %v1104
        %v1144 = vpack.c.b16 %v1129, %v1128
        %v1145 = vpack.c.b16 %v1131, %v1130
        %v1146 = vpack.c.b16 %v1133, %v1132
        %v1147 = vpack.c.b16 %v1135, %v1134
        %v1148 = vpack.c.b16 %v1137, %v1136
        %v1149 = vpack.c.b16 %v1139, %v1138
        %v1150 = vpack.c.b16 %v1141, %v1140
        %v1151 = vpack.c.b16 %v1143, %v1142
        %1160 = vmatprep.subr.bf16.mxu0 0
        %1161 = vmatpush1.bf16.msra.mxu0 %v1144
        %1162 = vmatprep.subr.bf16.mxu0 0
        %1163 = vmatpush1.bf16.msra.mxu0 %v1145
        %1164 = vmatprep.subr.bf16.mxu0 0
        %1165 = vmatpush1.bf16.msra.mxu0 %v1146
        %1166 = vmatprep.subr.bf16.mxu0 0
        %1167 = vmatpush1.bf16.msra.mxu0 %v1147
        %1168 = vmatprep.subr.bf16.mxu0 0
        %1169 = vmatpush1.bf16.msra.mxu0 %v1148
        %1170 = vmatprep.subr.bf16.mxu0 0
        %1171 = vmatpush1.bf16.msra.mxu0 %v1149
        %1172 = vmatprep.subr.bf16.mxu0 0
        %1173 = vmatpush1.bf16.msra.mxu0 %v1150
        %1174 = vmatprep.subr.bf16.mxu0 0
        %1175 = vmatpush1.bf16.msra.mxu0 %v1151
        %1176 = vmatprep.subr.bf16.mxu0 0
        %1177 = vmatpush1.bf16.msra.mxu0 0
        %1178 = vmatprep.subr.bf16.mxu0 0
        %1179 = vmatpush1.bf16.msra.mxu0 0
        %1180 = vmatprep.subr.bf16.mxu0 0
        %1181 = vmatpush1.bf16.msra.mxu0 0
        %1182 = vmatprep.subr.bf16.mxu0 0
        %1183 = vmatpush1.bf16.msra.mxu0 0
        %1184 = vmatprep.subr.bf16.mxu0 0
        %1185 = vmatpush1.bf16.msra.mxu0 0
        %1186 = vmatprep.subr.bf16.mxu0 0
        %1187 = vmatpush1.bf16.msra.mxu0 0
        %1188 = vmatprep.subr.bf16.mxu0 0
        %1189 = vmatpush1.bf16.msra.mxu0 0
        %1190 = vmatprep.subr.bf16.mxu0 0
        %1191 = vmatpush1.bf16.msra.mxu0 0
        %1192 = vmatprep.mubr.bf16.mxu0 0
        %1193 = vmatmul.mubr.bf16.gmra.mrb[0].mxu0 %v1081
        %v1194 = vpop.f32.mrb[0].mxu0
        %v1195 = vadd.f32 %v1110, %v1194
        %v1196 = vpop.f32.mrb[0].mxu0
        %v1197 = vpop.f32.mrb[0].mxu0
        %v1198 = vadd.f32 %v1110, %v1197
        %v1199 = vpop.f32.mrb[0].mxu0
        %1200 = vmatprep.mubr.bf16.mxu0 0
        %1201 = vmatmul.mubr.bf16.gmra.mrb[0].mxu0 %v1082
        %v1202 = vpop.f32.mrb[0].mxu0
        %v1203 = vadd.f32 %v1110, %v1202
        %v1204 = vpop.f32.mrb[0].mxu0
        %v1205 = vpop.f32.mrb[0].mxu0
        %v1206 = vadd.f32 %v1110, %v1205
        %v1207 = vpop.f32.mrb[0].mxu0
        %1208 = vmatprep.mubr.bf16.mxu0 0
        %1209 = vmatmul.mubr.bf16.gmra.mrb[0].mxu0 %v1083
        %v1210 = vpop.f32.mrb[0].mxu0
        %v1211 = vadd.f32 %v1110, %v1210
        %v1212 = vpop.f32.mrb[0].mxu0
        %v1213 = vpop.f32.mrb[0].mxu0
        %v1214 = vadd.f32 %v1110, %v1213
        %v1215 = vpop.f32.mrb[0].mxu0
        %1216 = vmatprep.mubr.bf16.mxu0 0
        %1217 = vmatmul.mubr.bf16.gmra.mrb[0].mxu0 %v1084
        %v1218 = vpop.f32.mrb[0].mxu0
        %v1219 = vadd.f32 %v1110, %v1218
        %v1220 = vpop.f32.mrb[0].mxu0
        %v1221 = vpop.f32.mrb[0].mxu0
        %v1222 = vadd.f32 %v1110, %v1221
        %v1223 = vpop.f32.mrb[0].mxu0
        %1224 = vmatprep.mubr.bf16.mxu0 0
        %1225 = vmatmul.mubr.bf16.gmra.mrb[0].mxu0 %v1085
        %v1226 = vpop.f32.mrb[0].mxu0
        %v1227 = vadd.f32 %v1110, %v1226
        %v1228 = vpop.f32.mrb[0].mxu0
        %v1229 = vpop.f32.mrb[0].mxu0
        %v1230 = vadd.f32 %v1110, %v1229
        %v1231 = vpop.f32.mrb[0].mxu0
        %1232 = vmatprep.mubr.bf16.mxu0 0
        %1233 = vmatmul.mubr.bf16.gmra.mrb[0].mxu0 %v1086
        %v1234 = vpop.f32.mrb[0].mxu0
        %v1235 = vadd.f32 %v1110, %v1234
        %v1236 = vpop.f32.mrb[0].mxu0
        %v1237 = vpop.f32.mrb[0].mxu0
        %v1238 = vadd.f32 %v1110, %v1237
        %v1239 = vpop.f32.mrb[0].mxu0
        %1240 = vmatprep.mubr.bf16.mxu0 0
        %1241 = vmatmul.mubr.bf16.gmra.mrb[0].mxu0 %v1087
        %v1242 = vpop.f32.mrb[0].mxu0
        %v1243 = vadd.f32 %v1110, %v1242
        %v1244 = vpop.f32.mrb[0].mxu0
        %v1245 = vpop.f32.mrb[0].mxu0
        %v1246 = vadd.f32 %v1110, %v1245
        %v1247 = vpop.f32.mrb[0].mxu0
        %1248 = vmatprep.mubr.bf16.mxu0 0
        %1249 = vmatmul.mubr.bf16.gmra.mrb[0].mxu0 %v1088
        %v1250 = vpop.f32.mrb[0].mxu0
        %v1251 = vadd.f32 %v1110, %v1250
        %v1252 = vpop.f32.mrb[0].mxu0
        %v1253 = vpop.f32.mrb[0].mxu0
        %v1254 = vadd.f32 %v1110, %v1253
        %v1255 = vpop.f32.mrb[0].mxu0
        %1256 = vdwg.mxu0
        %1257 = vst [vmem:[%s477] sm:$0xff] %v1195
        %1258 = vst [vmem:[%s477 + $0x8] sm:$0xff] %v1198
        %1259 = vst [vmem:[%s477 + $0x10] sm:$0xff] %v1203
        %1260 = vst [vmem:[%s477 + $0x18] sm:$0xff] %v1206
        %1261 = vst [vmem:[%s477 + $0x20] sm:$0xff] %v1211
        %1262 = vst [vmem:[%s477 + $0x28] sm:$0xff] %v1214
        %1263 = vst [vmem:[%s477 + $0x30] sm:$0xff] %v1219
        %1264 = vst [vmem:[%s477 + $0x38] sm:$0xff] %v1222
        %1265 = vst [vmem:[%s477 + $0x40] sm:$0xff] %v1227
        %1266 = vst [vmem:[%s477 + $0x48] sm:$0xff] %v1230
        %1267 = vst [vmem:[%s477 + $0x50] sm:$0xff] %v1235
        %1268 = vst [vmem:[%s477 + $0x58] sm:$0xff] %v1238
        %1269 = vst [vmem:[%s477 + $0x60] sm:$0xff] %v1243
        %1270 = vst [vmem:[%s477 + $0x68] sm:$0xff] %v1246
        %1271 = vst [vmem:[%s477 + $0x70] sm:$0xff] %v1251
        %1272 = vst [vmem:[%s477 + $0x78] sm:$0xff] %v1254
        %s1273 = sand.u32 %s237, 1
        %s1274 = scalar_lea.sflag [#allocation6], %s1273
        %s1275 = sand.u32 %s237, 1
        %s1276 = smul.addr %s1275, 128
        %s1277 = scalar_lea.vmem [#allocation12], %s1276
        // Predicated region
        $region65: #{_fused_forward.1} parent=47 // pred_check
          %p1278 = pneg %p247
        $region66: #{_fused_forward.1} parent=47 // pred_check_branch
          %1280 = sbr.rel (%p1278) target = $region68
        $region67: #{_fused_forward.1} parent=47 // pred_region
          %s1281 = smul.u32 16, %s35
          %s1283 = ssub.s32 2048, 2048
          %1284 = vsyncadd %s1274, %s1283
          %s1285 = smul.addr %s1281, 128
          %s1286 = scalar_lea.hbm %s8, %s1285
          %s1287 = sshll.u32 %s1277, 4
          %s1288 = int_to_ptr.vmem [resolvable:$true] %s1287
          %1293 = dma.vmem_to_hbm [thread:$0]  %s1288, 2048, %s1286, %s1274, 128, 128, 8
        $region68: #{_fused_forward.1} parent=47 // pred_fallthru
          _
      $region48: #{_fused_forward.1} parent=5 // pred_fallthru
        _
      %p1294 = scmp.le.s32.totalorder 2, %s30
      // Predicated region
      $region69: #{_fused_forward.1} parent=5 // pred_check
        %p1295 = pneg %p1294
      $region70: #{_fused_forward.1} parent=5 // pred_check_branch
        %1297 = sbr.rel (%p1295) target = $region72
      $region71: #{_fused_forward.1} parent=5 // pred_region
        %s1298 = ssub.s32 %s30, 2
        // Predicated region
        $region73: #{_fused_forward.1} parent=71 // pred_check
          %p1299 = pneg %p253
        $region74: #{_fused_forward.1} parent=71 // pred_check_branch
          %1301 = sbr.rel (%p1299) target = $region76
        $region75: #{_fused_forward.1} parent=71 // pred_region
          %s1302 = sand.u32 %s238, 1
          %s1303 = scalar_lea.sflag [#allocation6], %s1302
          %s1304 = sand.u32 %s238, 1
          %s1305 = smul.addr %s1304, 128
          %s1306 = scalar_lea.vmem [#allocation12], %s1305
          %1307 = dma.done %s1303, 2048
        $region76: #{_fused_forward.1} parent=71 // pred_fallthru
          _
      $region72: #{_fused_forward.1} parent=5 // pred_fallthru
        _
    $region6: #{_fused_forward.1} parent=1 // loop_footer
      %s34 = sadd.s32 1, %s30
    $region7: #{_fused_forward.1} parent=1 // loop_footer_branch
      %29 = sbr.rel target = $region3
    $region8: #{_fused_forward.1} parent=1 // loop_exit
      _
    %1308 = vsyncpa [#allocation5], 1
    %s1309 = scalar_lea.sflag [#allocation5], 1
    %1310 = vsyncpa %s1309, 1
    %1311 = vsyncpa [#allocation8], 1
    %s1312 = scalar_lea.sflag [#allocation8], 1
    %1313 = vsyncpa %s1312, 1
    %1314 = vsyncpa [#allocation11], 1
    %s1315 = scalar_lea.sflag [#allocation11], 1
    %1316 = vsyncpa %s1315, 1
    %1317 = vsyncpa [#allocation6], 1
    %s1318 = scalar_lea.sflag [#allocation6], 1
    %1319 = vsyncpa %s1318, 1

</llo_original>
